<compile_context>
chip_gen: v7x
topology: tpu7x:2x2x1
jax: 0.10.0
libtpu: 0.0.40
codegen_flags: <defaults>
</compile_context>

<pallas_src>
import jax
import jax.numpy as jnp
from jax.experimental import pallas as pl
from jax.experimental.pallas import tpu as pltpu

_IN, _HID, _OUT = 2, 5, 1


def mlp_kernel(w1_ref, b1_ref, w2_ref, b2_ref, x_ref, o_ref):
    """One lane-dense batch tile.

    x_ref : (2, T) VMEM  - features on sublanes, batch on lanes.
    o_ref : (1, T) VMEM  - dense single-row store per tile.
    w1_ref: (10,) SMEM   - flattened [in, hid] row-major.
    b1_ref: (5,)  SMEM,  w2_ref: (5,) SMEM,  b2_ref: (1,) SMEM.
    """
    x0 = x_ref[0:1, :]          # (1, T)
    x1 = x_ref[1:2, :]          # (1, T)
    acc = jnp.zeros_like(x0)
    # Fully unrolled over the 5 hidden units: pure VPU broadcast FMAs.
    for j in range(_HID):
        h_j = jnp.maximum(w1_ref[j] * x0 + w1_ref[_HID + j] * x1 + b1_ref[j], 0.0)
        acc = acc + w2_ref[j] * h_j
    o_ref[...] = (acc + b2_ref[0]).astype(o_ref.dtype)


def _round_up(n, m):
    return ((n + m - 1) // m) * m


def neural_network_forward_pallas(x, w1, b1, w2, b2, *, lane_tile=8192):
    """x: [B, 2] f32. w1: [2, 5] (torch weight transposed), b1: [5], w2: [5, 1], b2: [1]."""
    B = x.shape[0]
    tile = min(int(lane_tile), _round_up(max(B, 1), 128))
    tile = _round_up(tile, 128)
    b_pad = _round_up(B, tile)
    num_tiles = b_pad // tile

    # Batch-on-lanes layout, zero-padded on the lane axis to a tile multiple.
    x_t = jnp.pad(x.astype(jnp.float32).T, ((0, 0), (0, b_pad - B)))

    w1_flat = w1.astype(jnp.float32).reshape(-1)   # (10,) [in, hid] row-major
    b1_flat = b1.astype(jnp.float32).reshape(-1)   # (5,)
    w2_flat = w2.astype(jnp.float32).reshape(-1)   # (5,)
    b2_flat = b2.astype(jnp.float32).reshape(-1)   # (1,)

    out_t = pl.pallas_call(
        mlp_kernel,
        out_shape=jax.ShapeDtypeStruct((1, b_pad), jnp.float32),
        grid_spec=pltpu.PrefetchScalarGridSpec(
            num_scalar_prefetch=0,
            grid=(num_tiles,),
            in_specs=[
                pl.BlockSpec(memory_space=pltpu.SMEM),       # w1 (resident, no per-step DMA)
                pl.BlockSpec(memory_space=pltpu.SMEM),       # b1
                pl.BlockSpec(memory_space=pltpu.SMEM),       # w2
                pl.BlockSpec(memory_space=pltpu.SMEM),       # b2
                pl.BlockSpec((2, tile), lambda i: (0, i)),   # x tile (lane-dense)
            ],
            out_specs=pl.BlockSpec((1, tile), lambda i: (0, i)),
        ),
        compiler_params=pltpu.CompilerParams(
            dimension_semantics=("parallel",),               # shard batch across TCs (v7x)
        ),
    )(w1_flat, b1_flat, w2_flat, b2_flat, x_t)

    return out_t[0, :B].reshape(B, 1)


def neural_network_forward(x, w1, b1, w2, b2, *, min_pallas_batch=4096):
    """Gated entry point: tiny batches use the fused XLA expression (kernel
    launch + DMA overhead dominates ~200 FLOPs); large batches use Pallas."""
    if x.shape[0] < min_pallas_batch:
        return jnp.maximum(x @ w1 + b1, 0.0) @ w2 + b2
    return neural_network_forward_pallas(x, w1, b1, w2, b2)


def init_params(key):
    """Deterministic init matching the nn.Linear shapes (uniform, PyTorch-style bounds)."""
    k1, k2, k3, k4 = jax.random.split(key, 4)
    bound1 = 1.0 / jnp.sqrt(_IN)
    bound2 = 1.0 / jnp.sqrt(_HID)
    # Stored as [in, out] (torch weight transposed) so the math is x @ W.
    w1 = jax.random.uniform(k1, (_IN, _HID), jnp.float32, -bound1, bound1)
    b1 = jax.random.uniform(k2, (_HID,), jnp.float32, -bound1, bound1)
    w2 = jax.random.uniform(k3, (_HID, _OUT), jnp.float32, -bound2, bound2)
    b2 = jax.random.uniform(k4, (_OUT,), jnp.float32, -bound2, bound2)
    return w1, b1, w2, b2


def _reference(x, w1, b1, w2, b2):
    return jnp.maximum(x @ w1 + b1, 0.0) @ w2 + b2


if __name__ == "__main__":
    key = jax.random.PRNGKey(0)
    kx, kp, kx2 = jax.random.split(key, 3)
    w1, b1, w2, b2 = init_params(kp)

    # Small-batch check (forces the Pallas path so the kernel is exercised).
    batch = 8
    x = jax.random.normal(kx, (batch, _IN), dtype=jnp.float32)
    out = neural_network_forward_pallas(x, w1, b1, w2, b2)
    out = jax.block_until_ready(out)
    ref = _reference(x, w1, b1, w2, b2)
    assert out.shape == (batch, 1)
    assert jnp.allclose(out, ref, atol=1e-5, rtol=1e-5)

    # Multi-tile + ragged-tail check (grid of 3 tiles, B not a tile multiple).
    batch2 = 300
    x2 = jax.random.normal(kx2, (batch2, _IN), dtype=jnp.float32)
    out2 = neural_network_forward_pallas(x2, w1, b1, w2, b2, lane_tile=128)
    out2 = jax.block_until_ready(out2)
    ref2 = _reference(x2, w1, b1, w2, b2)
    assert out2.shape == (batch2, 1)
    assert jnp.allclose(out2, ref2, atol=1e-5, rtol=1e-5)

    # Gated wrapper (small batch -> fused XLA path) still matches.
    out3 = jax.block_until_ready(neural_network_forward(x, w1, b1, w2, b2))
    assert jnp.allclose(out3, ref, atol=1e-5, rtol=1e-5)

    print("KERNEL_OK")
</pallas_src>

<mosaic_0001>
module attributes {stable_mosaic.version = 11 : i64} {
  func.func @mlp_kernel(%arg0: i32, %arg1: memref<10xf32, #tpu.memory_space<smem>>, %arg2: memref<5xf32, #tpu.memory_space<smem>>, %arg3: memref<5xf32, #tpu.memory_space<smem>>, %arg4: memref<1xf32, #tpu.memory_space<smem>>, %arg5: memref<2x128xf32, #tpu.memory_space<vmem>>, %arg6: memref<1x128xf32, #tpu.memory_space<vmem>>) attributes {dimension_semantics = [#tpu.dimension_semantics<parallel>], iteration_bounds = array<i64: 1>, scalar_prefetch = 0 : i64, scratch_operands = 0 : i64, tpu.core_type = #tpu.core_type<tc>, window_params = [{transform_indices = @transform_0, window_bounds = array<i64: 10>}, {transform_indices = @transform_1, window_bounds = array<i64: 5>}, {transform_indices = @transform_2, window_bounds = array<i64: 5>}, {transform_indices = @transform_3, window_bounds = array<i64: 1>}, {transform_indices = @transform_4, window_bounds = array<i64: 2, 128>}, {transform_indices = @transform_5, window_bounds = array<i64: 1, 128>}]} {
    %c0 = arith.constant 0 : index
    %c0_0 = arith.constant 0 : index
    %0 = vector.load %arg5[%c0, %c0_0] : memref<2x128xf32, #tpu.memory_space<vmem>>, vector<1x128xf32>
    %c1 = arith.constant 1 : index
    %c0_1 = arith.constant 0 : index
    %1 = vector.load %arg5[%c1, %c0_1] : memref<2x128xf32, #tpu.memory_space<vmem>>, vector<1x128xf32>
    %cst = arith.constant 0.000000e+00 : f32
    %2 = vector.broadcast %cst : f32 to vector<1x128xf32>
    %c0_2 = arith.constant 0 : index
    %3 = memref.load %arg1[%c0_2] : memref<10xf32, #tpu.memory_space<smem>>
    %4 = vector.broadcast %3 : f32 to vector<1x128xf32>
    %5 = arith.mulf %4, %0 : vector<1x128xf32>
    %c5 = arith.constant 5 : index
    %6 = memref.load %arg1[%c5] : memref<10xf32, #tpu.memory_space<smem>>
    %7 = vector.broadcast %6 : f32 to vector<1x128xf32>
    %8 = arith.mulf %7, %1 : vector<1x128xf32>
    %9 = arith.addf %5, %8 : vector<1x128xf32>
    %c0_3 = arith.constant 0 : index
    %10 = memref.load %arg2[%c0_3] : memref<5xf32, #tpu.memory_space<smem>>
    %11 = vector.broadcast %10 : f32 to vector<1x128xf32>
    %12 = arith.addf %9, %11 : vector<1x128xf32>
    %cst_4 = arith.constant 0.000000e+00 : f32
    %13 = vector.broadcast %cst_4 : f32 to vector<1x128xf32>
    %14 = arith.maximumf %12, %13 : vector<1x128xf32>
    %c0_5 = arith.constant 0 : index
    %15 = memref.load %arg3[%c0_5] : memref<5xf32, #tpu.memory_space<smem>>
    %16 = vector.broadcast %15 : f32 to vector<1x128xf32>
    %17 = arith.mulf %16, %14 : vector<1x128xf32>
    %18 = arith.addf %2, %17 : vector<1x128xf32>
    %c1_6 = arith.constant 1 : index
    %19 = memref.load %arg1[%c1_6] : memref<10xf32, #tpu.memory_space<smem>>
    %20 = vector.broadcast %19 : f32 to vector<1x128xf32>
    %21 = arith.mulf %20, %0 : vector<1x128xf32>
    %c6 = arith.constant 6 : index
    %22 = memref.load %arg1[%c6] : memref<10xf32, #tpu.memory_space<smem>>
    %23 = vector.broadcast %22 : f32 to vector<1x128xf32>
    %24 = arith.mulf %23, %1 : vector<1x128xf32>
    %25 = arith.addf %21, %24 : vector<1x128xf32>
    %c1_7 = arith.constant 1 : index
    %26 = memref.load %arg2[%c1_7] : memref<5xf32, #tpu.memory_space<smem>>
    %27 = vector.broadcast %26 : f32 to vector<1x128xf32>
    %28 = arith.addf %25, %27 : vector<1x128xf32>
    %cst_8 = arith.constant 0.000000e+00 : f32
    %29 = vector.broadcast %cst_8 : f32 to vector<1x128xf32>
    %30 = arith.maximumf %28, %29 : vector<1x128xf32>
    %c1_9 = arith.constant 1 : index
    %31 = memref.load %arg3[%c1_9] : memref<5xf32, #tpu.memory_space<smem>>
    %32 = vector.broadcast %31 : f32 to vector<1x128xf32>
    %33 = arith.mulf %32, %30 : vector<1x128xf32>
    %34 = arith.addf %18, %33 : vector<1x128xf32>
    %c2 = arith.constant 2 : index
    %35 = memref.load %arg1[%c2] : memref<10xf32, #tpu.memory_space<smem>>
    %36 = vector.broadcast %35 : f32 to vector<1x128xf32>
    %37 = arith.mulf %36, %0 : vector<1x128xf32>
    %c7 = arith.constant 7 : index
    %38 = memref.load %arg1[%c7] : memref<10xf32, #tpu.memory_space<smem>>
    %39 = vector.broadcast %38 : f32 to vector<1x128xf32>
    %40 = arith.mulf %39, %1 : vector<1x128xf32>
    %41 = arith.addf %37, %40 : vector<1x128xf32>
    %c2_10 = arith.constant 2 : index
    %42 = memref.load %arg2[%c2_10] : memref<5xf32, #tpu.memory_space<smem>>
    %43 = vector.broadcast %42 : f32 to vector<1x128xf32>
    %44 = arith.addf %41, %43 : vector<1x128xf32>
    %cst_11 = arith.constant 0.000000e+00 : f32
    %45 = vector.broadcast %cst_11 : f32 to vector<1x128xf32>
    %46 = arith.maximumf %44, %45 : vector<1x128xf32>
    %c2_12 = arith.constant 2 : index
    %47 = memref.load %arg3[%c2_12] : memref<5xf32, #tpu.memory_space<smem>>
    %48 = vector.broadcast %47 : f32 to vector<1x128xf32>
    %49 = arith.mulf %48, %46 : vector<1x128xf32>
    %50 = arith.addf %34, %49 : vector<1x128xf32>
    %c3 = arith.constant 3 : index
    %51 = memref.load %arg1[%c3] : memref<10xf32, #tpu.memory_space<smem>>
    %52 = vector.broadcast %51 : f32 to vector<1x128xf32>
    %53 = arith.mulf %52, %0 : vector<1x128xf32>
    %c8 = arith.constant 8 : index
    %54 = memref.load %arg1[%c8] : memref<10xf32, #tpu.memory_space<smem>>
    %55 = vector.broadcast %54 : f32 to vector<1x128xf32>
    %56 = arith.mulf %55, %1 : vector<1x128xf32>
    %57 = arith.addf %53, %56 : vector<1x128xf32>
    %c3_13 = arith.constant 3 : index
    %58 = memref.load %arg2[%c3_13] : memref<5xf32, #tpu.memory_space<smem>>
    %59 = vector.broadcast %58 : f32 to vector<1x128xf32>
    %60 = arith.addf %57, %59 : vector<1x128xf32>
    %cst_14 = arith.constant 0.000000e+00 : f32
    %61 = vector.broadcast %cst_14 : f32 to vector<1x128xf32>
    %62 = arith.maximumf %60, %61 : vector<1x128xf32>
    %c3_15 = arith.constant 3 : index
    %63 = memref.load %arg3[%c3_15] : memref<5xf32, #tpu.memory_space<smem>>
    %64 = vector.broadcast %63 : f32 to vector<1x128xf32>
    %65 = arith.mulf %64, %62 : vector<1x128xf32>
    %66 = arith.addf %50, %65 : vector<1x128xf32>
    %c4 = arith.constant 4 : index
    %67 = memref.load %arg1[%c4] : memref<10xf32, #tpu.memory_space<smem>>
    %68 = vector.broadcast %67 : f32 to vector<1x128xf32>
    %69 = arith.mulf %68, %0 : vector<1x128xf32>
    %c9 = arith.constant 9 : index
    %70 = memref.load %arg1[%c9] : memref<10xf32, #tpu.memory_space<smem>>
    %71 = vector.broadcast %70 : f32 to vector<1x128xf32>
    %72 = arith.mulf %71, %1 : vector<1x128xf32>
    %73 = arith.addf %69, %72 : vector<1x128xf32>
    %c4_16 = arith.constant 4 : index
    %74 = memref.load %arg2[%c4_16] : memref<5xf32, #tpu.memory_space<smem>>
    %75 = vector.broadcast %74 : f32 to vector<1x128xf32>
    %76 = arith.addf %73, %75 : vector<1x128xf32>
    %cst_17 = arith.constant 0.000000e+00 : f32
    %77 = vector.broadcast %cst_17 : f32 to vector<1x128xf32>
    %78 = arith.maximumf %76, %77 : vector<1x128xf32>
    %c4_18 = arith.constant 4 : index
    %79 = memref.load %arg3[%c4_18] : memref<5xf32, #tpu.memory_space<smem>>
    %80 = vector.broadcast %79 : f32 to vector<1x128xf32>
    %81 = arith.mulf %80, %78 : vector<1x128xf32>
    %82 = arith.addf %66, %81 : vector<1x128xf32>
    %c0_19 = arith.constant 0 : index
    %83 = memref.load %arg4[%c0_19] : memref<1xf32, #tpu.memory_space<smem>>
    %84 = vector.broadcast %83 : f32 to vector<1x128xf32>
    %85 = arith.addf %82, %84 : vector<1x128xf32>
    %c0_20 = arith.constant 0 : index
    %c0_21 = arith.constant 0 : index
    %86 = vector.load %arg6[%c0_20, %c0_21] : memref<1x128xf32, #tpu.memory_space<vmem>>, vector<1x128xf32>
    tpu.vector_store %arg6[%c0_20, %c0_21], %85 {strides = array<i32>} : memref<1x128xf32, #tpu.memory_space<vmem>>, vector<1x128xf32>,
    return
  }
  func.func @transform_0(%arg0: i32) -> i32 {
    %c0_i32 = arith.constant 0 : i32
    %c0_i32_0 = arith.constant 0 : i32
    return %c0_i32 : i32
  }
  func.func @transform_1(%arg0: i32) -> i32 {
    %c0_i32 = arith.constant 0 : i32
    %c0_i32_0 = arith.constant 0 : i32
    return %c0_i32 : i32
  }
  func.func @transform_2(%arg0: i32) -> i32 {
    %c0_i32 = arith.constant 0 : i32
    %c0_i32_0 = arith.constant 0 : i32
    return %c0_i32 : i32
  }
  func.func @transform_3(%arg0: i32) -> i32 {
    %c0_i32 = arith.constant 0 : i32
    %c0_i32_0 = arith.constant 0 : i32
    return %c0_i32 : i32
  }
  func.func @transform_4(%arg0: i32) -> (i32, i32) {
    %c0_i32 = arith.constant 0 : i32
    %c0_i32_0 = arith.constant 0 : i32
    return %c0_i32, %arg0 : i32, i32
  }
  func.func @transform_5(%arg0: i32) -> (i32, i32) {
    %c0_i32 = arith.constant 0 : i32
    %c0_i32_0 = arith.constant 0 : i32
    return %c0_i32, %arg0 : i32, i32
  }
}

</mosaic_0001>

<llo_original>
// kernel: tpu_custom_call.1
$region0: #{tpu_custom_call.1}
  #allocation0 [shape = 'u32[]', space=smem, size = 0x4, offset = 0x4, fixed_abs, tag = 'smem constant byte address 0x4 - core index']
  #allocation1 [shape = 'u32[144,128]{1,0:T(1,128)}', space=vmem, size = 0x12000, scoped, tag = 'internal scratch']
  #allocation2 [shape = 'f32[1]{0:T(128)S(6)}', space=smem, size = 0x200, scoped, tag = 'scoped memory for tpu_custom_call.1']
  %s0 = inlined_call_operand.vmem [shape: f32[10], index: 0, kind: input, shape index: {}]
  %s1 = inlined_call_operand.vmem [shape: f32[5], index: 1, kind: input, shape index: {}]
  %s2 = inlined_call_operand.vmem [shape: f32[5], index: 2, kind: input, shape index: {}]
  %s3 = inlined_call_operand.<no memory space> [shape: f32[1], index: 3, kind: input, shape index: {}]
  %s4 = inlined_call_operand.vmem [shape: f32[2,128], index: 4, kind: input, shape index: {}]
  %s5 = inlined_call_operand.hbm [shape: f32[1,128], index: 5, kind: output, shape index: {}]
  %s6 = sld [smem:[#allocation0]]
  $region42: #{tpu_custom_call.1} parent=0
    _
  %s8 = ssub.s32 1, %s6
  %s9 = scalar_select 0, %s8, %s6
  %10 = sst [smem:[#allocation2]] %s3
  $region1: #{tpu_custom_call.1} parent=0
    #allocation3 [shape = 'u8[512]{0}', space=smem, size = 0x200, scoped, tag = 'input window, operand 0, single buffered']
    #allocation4 [shape = 's32[1]{0}', space=sflag, size = 0x4, scoped, tag = 'scoped memory for tpu_custom_call.1']
    #allocation5 [shape = 's32[1]{0}', space=sflag, size = 0x4, scoped, tag = 'scoped memory for tpu_custom_call.1']
    #allocation6 [shape = 'u8[512]{0}', space=smem, size = 0x200, scoped, tag = 'input window, operand 1, single buffered']
    #allocation7 [shape = 's32[1]{0}', space=sflag, size = 0x4, scoped, tag = 'scoped memory for tpu_custom_call.1']
    #allocation8 [shape = 'u8[512]{0}', space=smem, size = 0x200, scoped, tag = 'input window, operand 2, single buffered']
    #allocation9 [shape = 'u8[512]{0}', space=vmem, size = 0x400, scoped, tag = 'output window, operand 0, single buffered']
    %11 = vsyncpa [#allocation5], 0
    %12 = vsyncpa [#allocation7], 0
    %13 = vsyncpa [#allocation4], 0
    // Predicated region
    $region2: #{tpu_custom_call.1} parent=1 // pred_check
      _
    $region3: #{tpu_custom_call.1} parent=1 // pred_check_branch
      %15 = sbr.rel (0) target = $region5
    $region4: #{tpu_custom_call.1} parent=1 // pred_region
      %s17 = ssub.s32 16, 16
      %18 = vsyncadd [#allocation5], %s17
      %s20 = sshll.u32 %s0, 4
      %s21 = int_to_ptr.vmem [resolvable:$true] %s20
      %23 = dma.vmem_to_smem %s21, 16, [#allocation3], [#allocation5]
    $region5: #{tpu_custom_call.1} parent=1 // pred_fallthru
      _
    // Predicated region
    $region6: #{tpu_custom_call.1} parent=1 // pred_check
      _
    $region7: #{tpu_custom_call.1} parent=1 // pred_check_branch
      %25 = sbr.rel (0) target = $region9
    $region8: #{tpu_custom_call.1} parent=1 // pred_region
      %s27 = ssub.s32 16, 16
      %28 = vsyncadd [#allocation7], %s27
      %s30 = sshll.u32 %s1, 4
      %s31 = int_to_ptr.vmem [resolvable:$true] %s30
      %33 = dma.vmem_to_smem %s31, 16, [#allocation6], [#allocation7]
    $region9: #{tpu_custom_call.1} parent=1 // pred_fallthru
      _
    // Predicated region
    $region10: #{tpu_custom_call.1} parent=1 // pred_check
      _
    $region11: #{tpu_custom_call.1} parent=1 // pred_check_branch
      %35 = sbr.rel (0) target = $region13
    $region12: #{tpu_custom_call.1} parent=1 // pred_region
      %s37 = ssub.s32 16, 16
      %38 = vsyncadd [#allocation7], %s37
      %s40 = sshll.u32 %s2, 4
      %s41 = int_to_ptr.vmem [resolvable:$true] %s40
      %43 = dma.vmem_to_smem %s41, 16, [#allocation8], [#allocation7]
    $region13: #{tpu_custom_call.1} parent=1 // pred_fallthru
      _
    // Predicated region
    $region14: #{tpu_custom_call.1} parent=1 // pred_check
      _
    $region15: #{tpu_custom_call.1} parent=1 // pred_check_branch
      %45 = sbr.rel (0) target = $region17
    $region16: #{tpu_custom_call.1} parent=1 // pred_region
      _
    $region17: #{tpu_custom_call.1} parent=1 // pred_fallthru
      _
    // Predicated region
    $region18: #{tpu_custom_call.1} parent=1 // pred_check
      _
    $region19: #{tpu_custom_call.1} parent=1 // pred_check_branch
      %47 = sbr.rel (0) target = $region21
    $region20: #{tpu_custom_call.1} parent=1 // pred_region
      _
    $region21: #{tpu_custom_call.1} parent=1 // pred_fallthru
      _
    // Predicated region
    $region22: #{tpu_custom_call.1} parent=1 // pred_check
      _
    $region23: #{tpu_custom_call.1} parent=1 // pred_check_branch
      %49 = sbr.rel (0) target = $region25
    $region24: #{tpu_custom_call.1} parent=1 // pred_region
      %50 = dma.done [#allocation5], 16
    $region25: #{tpu_custom_call.1} parent=1 // pred_fallthru
      _
    // Predicated region
    $region26: #{tpu_custom_call.1} parent=1 // pred_check
      _
    $region27: #{tpu_custom_call.1} parent=1 // pred_check_branch
      %52 = sbr.rel (0) target = $region29
    $region28: #{tpu_custom_call.1} parent=1 // pred_region
      %53 = dma.done [#allocation7], 16
    $region29: #{tpu_custom_call.1} parent=1 // pred_fallthru
      _
    // Predicated region
    $region30: #{tpu_custom_call.1} parent=1 // pred_check
      _
    $region31: #{tpu_custom_call.1} parent=1 // pred_check_branch
      %55 = sbr.rel (0) target = $region33
    $region32: #{tpu_custom_call.1} parent=1 // pred_region
      %56 = dma.done [#allocation7], 16
    $region33: #{tpu_custom_call.1} parent=1 // pred_fallthru
      _
    %57 = sfence
    %v58 = vld [vmem:[%s4] sm:$0x1]
    %v59 = vld [vmem:[%s4 + $0x1] sm:$0x1]
    %s60 = sld [smem:[#allocation3]]
    %v61 = vstv %s60
    %v62 = vmul.f32 %v61, %v58
    %s63 = sld [smem:[#allocation3 + $0x5]]
    %v64 = vstv %s63
    %v65 = vmul.f32 %v64, %v59
    %v66 = vadd.f32 %v62, %v65
    %s67 = sld [smem:[#allocation6]]
    %v68 = vstv %s67
    %v69 = vadd.f32 %v66, %v68
    %v70 = vmax.f32 %v69, 0.0
    %s71 = sld [smem:[#allocation8]]
    %v72 = vstv %s71
    %v73 = vmul.f32 %v72, %v70
    %v74 = vadd.f32 %v73, 0.0
    %s75 = sld [smem:[#allocation3 + $0x1]]
    %v76 = vstv %s75
    %v77 = vmul.f32 %v76, %v58
    %s78 = sld [smem:[#allocation3 + $0x6]]
    %v79 = vstv %s78
    %v80 = vmul.f32 %v79, %v59
    %v81 = vadd.f32 %v77, %v80
    %s82 = sld [smem:[#allocation6 + $0x1]]
    %v83 = vstv %s82
    %v84 = vadd.f32 %v81, %v83
    %v85 = vmax.f32 %v84, 0.0
    %s86 = sld [smem:[#allocation8 + $0x1]]
    %v87 = vstv %s86
    %v88 = vmul.f32 %v87, %v85
    %v89 = vadd.f32 %v74, %v88
    %s90 = sld [smem:[#allocation3 + $0x2]]
    %v91 = vstv %s90
    %v92 = vmul.f32 %v91, %v58
    %s93 = sld [smem:[#allocation3 + $0x7]]
    %v94 = vstv %s93
    %v95 = vmul.f32 %v94, %v59
    %v96 = vadd.f32 %v92, %v95
    %s97 = sld [smem:[#allocation6 + $0x2]]
    %v98 = vstv %s97
    %v99 = vadd.f32 %v96, %v98
    %v100 = vmax.f32 %v99, 0.0
    %s101 = sld [smem:[#allocation8 + $0x2]]
    %v102 = vstv %s101
    %v103 = vmul.f32 %v102, %v100
    %v104 = vadd.f32 %v89, %v103
    %s105 = sld [smem:[#allocation3 + $0x3]]
    %v106 = vstv %s105
    %v107 = vmul.f32 %v106, %v58
    %s108 = sld [smem:[#allocation3 + $0x8]]
    %v109 = vstv %s108
    %v110 = vmul.f32 %v109, %v59
    %v111 = vadd.f32 %v107, %v110
    %s112 = sld [smem:[#allocation6 + $0x3]]
    %v113 = vstv %s112
    %v114 = vadd.f32 %v111, %v113
    %v115 = vmax.f32 %v114, 0.0
    %s116 = sld [smem:[#allocation8 + $0x3]]
    %v117 = vstv %s116
    %v118 = vmul.f32 %v117, %v115
    %v119 = vadd.f32 %v104, %v118
    %s120 = sld [smem:[#allocation3 + $0x4]]
    %v121 = vstv %s120
    %v122 = vmul.f32 %v121, %v58
    %s123 = sld [smem:[#allocation3 + $0x9]]
    %v124 = vstv %s123
    %v125 = vmul.f32 %v124, %v59
    %v126 = vadd.f32 %v122, %v125
    %s127 = sld [smem:[#allocation6 + $0x4]]
    %v128 = vstv %s127
    %v129 = vadd.f32 %v126, %v128
    %v130 = vmax.f32 %v129, 0.0
    %s131 = sld [smem:[#allocation8 + $0x4]]
    %v132 = vstv %s131
    %v133 = vmul.f32 %v132, %v130
    %v134 = vadd.f32 %v119, %v133
    %s135 = sld [smem:[#allocation2]]
    %v136 = vstv %s135
    %v137 = vadd.f32 %v134, %v136
    %138 = vst [vmem:[#allocation9] sm:$0x1] %v137
    // Predicated region
    $region34: #{tpu_custom_call.1} parent=1 // pred_check
      _
    $region35: #{tpu_custom_call.1} parent=1 // pred_check_branch
      %140 = sbr.rel (0) target = $region37
    $region36: #{tpu_custom_call.1} parent=1 // pred_region
      %s142 = ssub.s32 16, 16
      %143 = vsyncadd [#allocation4], %s142
      %s145 = sshll.u32 [#allocation9], 4
      %s146 = int_to_ptr.vmem [resolvable:$true] %s145
      %148 = dma.vmem_to_hbm [thread:$0]  %s146, 16, %s5, [#allocation4]
    $region37: #{tpu_custom_call.1} parent=1 // pred_fallthru
      _
    // Predicated region
    $region38: #{tpu_custom_call.1} parent=1 // pred_check
      _
    $region39: #{tpu_custom_call.1} parent=1 // pred_check_branch
      %150 = sbr.rel (0) target = $region41
    $region40: #{tpu_custom_call.1} parent=1 // pred_region
      %151 = dma.done [#allocation4], 16
    $region41: #{tpu_custom_call.1} parent=1 // pred_fallthru
      _
    %152 = vsyncpa [#allocation4], 1
    %153 = vsyncpa [#allocation5], 1
    %154 = vsyncpa [#allocation7], 1

</llo_original>
